<compile_context>
chip_gen: v7x
topology: tpu7x:2x2x1
jax: 0.10.0
libtpu: 0.0.40
codegen_flags: <defaults>
</compile_context>

<pallas_src>
import math

import numpy as np
import jax
import jax.numpy as jnp
from jax.experimental import pallas as pl
from jax.experimental.pallas import tpu as pltpu

EPS = 1e-8


# -----------------------------------------------------------------------------
# Counter-based in-kernel RNG (pure VPU integer ops — portable to every TPU
# generation and to interpret mode, unlike pltpu.prng_*).
# -----------------------------------------------------------------------------
def _mix32(x):
    """lowbias32 integer mixer (Wellons): high-avalanche 32-bit hash round."""
    x = x ^ (x >> 16)
    x = x * jnp.uint32(0x7FEB352D)
    x = x ^ (x >> 15)
    x = x * jnp.uint32(0x846CA68B)
    x = x ^ (x >> 16)
    return x


def _uniform01(ctr_u32):
    """Two mix rounds -> top 24 bits as a uniform float32 in [0, 1)."""
    h = _mix32(ctr_u32)
    h = _mix32(h ^ jnp.uint32(0x9E3779B9))
    frac = (h >> 8).astype(jnp.int32)              # in [0, 2^24): exact in f32
    return frac.astype(jnp.float32) * jnp.float32(1.0 / (1 << 24))


# -----------------------------------------------------------------------------
# Kernels.  Activations live in HBM as (G, U*HW) with G = N*C//U, HW = H*W — a
# pure view reshape of NCHW; the U competing planes are lane-aligned static
# slices, so loads/stores are dense vregs and the U-reduction is plain VPU work.
# -----------------------------------------------------------------------------
def _make_lwta_u2_kernel(HW, TG, G_valid, num_tiles, training):
    """Specialized U == 2 kernel (sigmoid / softplus formulation)."""
    log_p = math.log(0.5)
    ragged = num_tiles * TG > G_valid

    def kernel(key_ref, inv_temp_ref, x_ref, out_ref, *maybe_klp):
        i = pl.program_id(0)
        inv_temp = inv_temp_ref[0]
        key = key_ref[0]

        x0 = x_ref[:, 0:HW].astype(jnp.float32)
        x1 = x_ref[:, HW:2 * HW].astype(jnp.float32)

        # One uniform draw per competing pair.  The difference of the two
        # i.i.d. Gumbels of the reference is exactly Logistic(0, 1), which is
        # sampled directly as log(u) - log(1-u): 2 EUP logs per pair instead
        # of 4 (distributionally identical for the soft, hard=False branch).
        rows = jax.lax.broadcasted_iota(jnp.int32, (TG, HW), 0) + i * TG
        cols = jax.lax.broadcasted_iota(jnp.int32, (TG, HW), 1)
        ctr = (rows * HW + cols + key).astype(jnp.uint32)
        u = _uniform01(ctr)
        noise = jnp.log(u + EPS) - jnp.log(1.0 - u + EPS)

        # Concrete relaxation over the two planes via a numerically stable
        # sigmoid:  y0 = sigmoid(d),  y1 = 1 - y0,  d = t0 - t1.
        d = (x0 - x1 + noise) * inv_temp
        e = jnp.exp(-jnp.abs(d))                     # exp(-|d|) in (0, 1]
        inv_den = 1.0 / (1.0 + e)                    # exact reciprocal
        pos = d >= 0.0
        y0 = jnp.where(pos, inv_den, e * inv_den)
        y1 = 1.0 - y0

        out_ref[:, 0:HW] = (x0 * y0).astype(out_ref.dtype)
        out_ref[:, HW:2 * HW] = (x1 * y1).astype(out_ref.dtype)

        if training:                                 # KL compiled out in eval
            klp_ref = maybe_klp[0]
            # log y0 = -softplus(-d), log y1 = -softplus(d) (stable form).
            log1p_e = jnp.log(1.0 + e)
            log_y0 = -(jnp.maximum(-d, 0.0) + log1p_e)
            log_y1 = -(jnp.maximum(d, 0.0) + log1p_e)
            kl = y0 * (log_y0 - log_p) + y1 * (log_y1 - log_p)
            if ragged:                               # mask rows past true G
                kl = jnp.where(rows < G_valid, kl, 0.0)
            klp_ref[...] = jnp.broadcast_to(jnp.sum(kl), (1, 8, 128))

    return kernel


def _make_lwta_generic_kernel(U, HW, TG, G_valid, num_tiles, training):
    """General-U kernel: per-plane Gumbel + stable softmax over the U planes."""
    log_p = math.log(1.0 / U)
    ragged = num_tiles * TG > G_valid

    def kernel(key_ref, inv_temp_ref, x_ref, out_ref, *maybe_klp):
        i = pl.program_id(0)
        inv_temp = inv_temp_ref[0]
        key = key_ref[0]

        rows = jax.lax.broadcasted_iota(jnp.int32, (TG, HW), 0) + i * TG
        cols = jax.lax.broadcasted_iota(jnp.int32, (TG, HW), 1)
        base = rows * (U * HW) + cols + key          # unique counter / element

        # Pass 1: logits t_u = (x_u + Gumbel_u) * (1/temperature) and max.
        ts = []
        m = None
        for u in range(U):
            x_u = x_ref[:, u * HW:(u + 1) * HW].astype(jnp.float32)
            un = _uniform01((base + u * HW).astype(jnp.uint32))
            g = -jnp.log(-jnp.log(un + EPS) + EPS)
            t_u = (x_u + g) * inv_temp
            ts.append(t_u)
            m = t_u if m is None else jnp.maximum(m, t_u)

        # Pass 2: stable softmax terms (kept alongside ts so the KL log-prob
        # (t - m) - log_s needs no extra per-element EUP log).
        es = [jnp.exp(t - m) for t in ts]
        s = es[0]
        for e in es[1:]:
            s = s + e
        inv_s = 1.0 / s                              # exact (1/U per element)
        log_s = jnp.log(s) if training else None

        # Pass 3: gated output (+ per-element KL in training).
        kl_acc = None
        for u in range(U):
            y_u = es[u] * inv_s
            x_u = x_ref[:, u * HW:(u + 1) * HW].astype(jnp.float32)
            out_ref[:, u * HW:(u + 1) * HW] = (x_u * y_u).astype(out_ref.dtype)
            if training:
                log_y_u = (ts[u] - m) - log_s
                kl_u = y_u * (log_y_u - log_p)
                kl_acc = kl_u if kl_acc is None else kl_acc + kl_u

        if training:
            klp_ref = maybe_klp[0]
            if ragged:
                kl_acc = jnp.where(rows < G_valid, kl_acc, 0.0)
            klp_ref[...] = jnp.broadcast_to(jnp.sum(kl_acc), (1, 8, 128))

    return kernel


# -----------------------------------------------------------------------------
# Tiling / VMEM sizing.
# -----------------------------------------------------------------------------
def _vmem_params():
    """(tile-sizing budget, vmem_limit_bytes), generation-aware.

    v5e/v6e have 128 MiB VMEM per core; v7x only 64 MiB.  Fall back to the
    conservative v7x sizing when the query is unavailable (CPU / interpret).
    """
    try:
        cap = int(pltpu.get_tpu_info().vmem_capacity_bytes)
    except Exception:
        cap = 0
    if cap >= 96 * 1024 * 1024:                       # v5e / v6e class
        return 48 * 1024 * 1024, 80 * 1024 * 1024
    return 24 * 1024 * 1024, 32 * 1024 * 1024         # v7x / unknown


def _choose_tile_rows(G, row_bytes, vmem_budget, min_tiles=4):
    """Rows per tile: a multiple of 8 (or the full extent when G <= 8).

    Sized so the per-tile working set fits the VMEM budget while giving the
    pipeline / megacore at least `min_tiles` grid steps when G is large enough
    (a single-step grid leaves v7x's second TensorCore idle and gives the DMA
    pipeline nothing to overlap).  The last tile may be ragged — Pallas clips
    the writeback and the kernel masks KL rows >= G.
    """
    if G <= 8:
        return G
    biggest = (G // 8) * 8
    budget_rows = max(8, (vmem_budget // max(row_bytes, 1)) // 8 * 8)
    target_rows = max(8, ((G + min_tiles - 1) // min_tiles + 7) // 8 * 8)
    return max(8, min(biggest, budget_rows, target_rows))


# -----------------------------------------------------------------------------
# Wrapper.
# -----------------------------------------------------------------------------
def lwta_forward(x, temp_param, seed=0, U=2, training=True, temp_test=0.01):
    """JAX/Pallas equivalent of LWTA.forward for 4-D NCHW activations.

    Returns (out, kl): `out` is what the PyTorch forward returns, `kl` is what
    it stores in self.kl_ (0.0 in eval, matching lwta_activation).
    """
    N, C, H, W = x.shape
    assert C % U == 0, "channel dim must be divisible by U"
    HW = H * W
    # TODO(synk): H*W that is not a multiple of 128 would need lane padding /
    # refolding for dense stores; not needed for the shapes exercised here.
    assert HW % 128 == 0, "H*W must be a multiple of 128 (lane dim)"

    G = N * (C // U)
    x2 = x.reshape(G, U * HW)                 # pure view reshape, no transpose

    if training:
        temperature = jax.nn.softplus(jnp.asarray(temp_param, jnp.float32))
    else:
        temperature = jnp.float32(temp_test)
    inv_temp = jnp.reshape(1.0 / temperature, (1,)).astype(jnp.float32)

    # Host-scrambled 31-bit stream key; randoms are counter-based per element,
    # so they are independent of the tiling (grid-invariant).
    key = (int(seed) * 0x9E3779B1 + 0x7F4A7C15) & 0x7FFFFFFF
    key_arr = jnp.asarray([key], dtype=jnp.int32)

    # Tile the G axis.  row_bytes ~ double-buffered native I/O tiles plus the
    # live f32 compute slabs per row.
    itemsize = x.dtype.itemsize
    f32_slabs = 14 if U == 2 else (2 * U + 10)
    row_bytes = 4 * U * HW * itemsize + f32_slabs * HW * 4
    vmem_budget, vmem_limit = _vmem_params()
    tg = _choose_tile_rows(G, row_bytes, vmem_budget)
    num_tiles = pl.cdiv(G, tg)

    if U == 2:
        kernel = _make_lwta_u2_kernel(HW, tg, G, num_tiles, training)
    else:
        kernel = _make_lwta_generic_kernel(U, HW, tg, G, num_tiles, training)

    in_specs = [
        pl.BlockSpec(memory_space=pltpu.SMEM),            # RNG stream key
        pl.BlockSpec(memory_space=pltpu.SMEM),            # 1 / temperature
        pl.BlockSpec((tg, U * HW), lambda i: (i, 0)),     # activations
    ]
    out_spec_x = pl.BlockSpec((tg, U * HW), lambda i: (i, 0))

    if training:
        out_shape = (
            jax.ShapeDtypeStruct((G, U * HW), x.dtype),
            jax.ShapeDtypeStruct((num_tiles, 8, 128), jnp.float32),
        )
        out_specs = (
            out_spec_x,
            pl.BlockSpec((1, 8, 128), lambda i: (i, 0, 0)),  # lane-dense KL partials
        )
    else:
        out_shape = jax.ShapeDtypeStruct((G, U * HW), x.dtype)
        out_specs = out_spec_x

    result = pl.pallas_call(
        kernel,
        out_shape=out_shape,
        grid=(num_tiles,),
        in_specs=in_specs,
        out_specs=out_specs,
        compiler_params=pltpu.CompilerParams(
            dimension_semantics=("parallel",),
            vmem_limit_bytes=vmem_limit,
        ),
    )(key_arr, inv_temp, x2)

    if training:
        out2, kl_part = result
        kl = jnp.sum(kl_part[:, 0, 0]) / jnp.float32(N * U * H * W) / 1000.0
    else:
        out2 = result
        kl = jnp.float32(0.0)

    out = out2.reshape(N, C, H, W)
    # TODO(synk): the 2-D (fully-connected) branch of lwta_activation is not
    # implemented here; only the 4-D conv branch used by this module is.
    return out, kl


if __name__ == "__main__":
    key = jax.random.PRNGKey(0)
    N, C, H, W = 2, 4, 16, 16
    U = 2
    x = jax.random.normal(key, (N, C, H, W), dtype=jnp.float32)
    temp_param = jnp.float32(-0.01)           # matches nn.Parameter(tensor(-0.01))

    out, kl = lwta_forward(x, temp_param, seed=0, U=U, training=True)
    out = jax.block_until_ready(out)
    kl = jax.block_until_ready(kl)

    out_np = np.asarray(out, dtype=np.float64)
    x_np = np.asarray(x, dtype=np.float64)
    assert np.all(np.isfinite(out_np)) and np.isfinite(float(kl))

    # Noise is generated on-device, so verify structurally: recover the mask
    # y = out / x and check it is a valid softmax over the U competing planes.
    G, HW = N * (C // U), H * W
    y = out_np.reshape(G, U, HW) / x_np.reshape(G, U, HW)
    assert np.all(y > -1e-6) and np.all(y < 1.0 + 1e-3)
    np.testing.assert_allclose(y.sum(axis=1), 1.0, atol=1e-3)

    # KL consistency with the masks the kernel actually produced.
    kl_ref = np.sum(y * (np.log(y + EPS) - np.log(1.0 / U)))
    kl_ref = kl_ref / (N * U * H * W) / 1000.0
    np.testing.assert_allclose(float(kl), kl_ref, rtol=5e-2, atol=2e-6)

    # Distributional check of the in-kernel noise and temperature: for U=2,
    # tau*log(y0/y1) - (x0 - x1) = g0 - g1 ~ Logistic(0, 1)
    # (mean 0, std pi/sqrt(3) ~= 1.814).
    tau = float(jax.nn.softplus(temp_param))
    dx = x_np.reshape(G, U, HW)[:, 0, :] - x_np.reshape(G, U, HW)[:, 1, :]
    dg = tau * np.log(y[:, 0, :] / y[:, 1, :]) - dx
    assert abs(dg.mean()) < 0.25, dg.mean()
    assert 1.5 < dg.std() < 2.15, dg.std()

    # Eval path: temp_test temperature, KL output/work compiled out, kl == 0.
    out_eval, kl_eval = lwta_forward(x, temp_param, seed=1, U=U, training=False)
    out_eval = jax.block_until_ready(out_eval)
    assert np.all(np.isfinite(np.asarray(out_eval)))
    assert float(kl_eval) == 0.0

    # Generic-U path (U = 4) smoke test: masks still sum to 1 over U.
    x4 = jax.random.normal(jax.random.PRNGKey(1), (2, 8, 16, 16), jnp.float32)
    out4, kl4 = lwta_forward(x4, temp_param, seed=2, U=4, training=True)
    out4 = jax.block_until_ready(out4)
    assert np.all(np.isfinite(np.asarray(out4))) and np.isfinite(float(kl4))
    y4 = (np.asarray(out4, np.float64).reshape(4, 4, 256) /
          np.asarray(x4, np.float64).reshape(4, 4, 256))
    np.testing.assert_allclose(y4.sum(axis=1), 1.0, atol=1e-3)

    print("KERNEL_OK")
</pallas_src>

<mosaic_0001>
module attributes {stable_mosaic.version = 11 : i64} {
  func.func @kernel(%arg0: i32, %arg1: memref<1xi32, #tpu.memory_space<smem>>, %arg2: memref<1xf32, #tpu.memory_space<smem>>, %arg3: memref<4x512xf32, #tpu.memory_space<vmem>>, %arg4: memref<4x512xf32, #tpu.memory_space<vmem>>, %arg5: memref<1x8x128xf32, #tpu.memory_space<vmem>>) attributes {dimension_semantics = [#tpu.dimension_semantics<parallel>], iteration_bounds = array<i64: 1>, scalar_prefetch = 0 : i64, scratch_operands = 0 : i64, tpu.core_type = #tpu.core_type<tc>, window_params = [{transform_indices = @transform_0, window_bounds = array<i64: 1>}, {transform_indices = @transform_1, window_bounds = array<i64: 1>}, {transform_indices = @transform_2, window_bounds = array<i64: 4, 512>}, {transform_indices = @transform_3, window_bounds = array<i64: 4, 512>}, {transform_indices = @transform_4, window_bounds = array<i64: 1, 8, 128>}]} {
    %c0 = arith.constant 0 : index
    %0 = memref.load %arg2[%c0] : memref<1xf32, #tpu.memory_space<smem>>
    %c0_0 = arith.constant 0 : index
    %1 = memref.load %arg1[%c0_0] : memref<1xi32, #tpu.memory_space<smem>>
    %c0_1 = arith.constant 0 : index
    %c0_2 = arith.constant 0 : index
    %2 = vector.load %arg3[%c0_1, %c0_2] : memref<4x512xf32, #tpu.memory_space<vmem>>, vector<4x256xf32>
    %c0_3 = arith.constant 0 : index
    %c256 = arith.constant 256 : index
    %3 = vector.load %arg3[%c0_3, %c256] : memref<4x512xf32, #tpu.memory_space<vmem>>, vector<4x256xf32>
    %4 = tpu.iota {dimensions = array<i32: 0>} : vector<4x256xi32>
    %c4_i32 = arith.constant 4 : i32
    %5 = arith.muli %arg0, %c4_i32 : i32
    %6 = vector.broadcast %5 : i32 to vector<4x256xi32>
    %7 = arith.addi %4, %6 : vector<4x256xi32>
    %8 = tpu.iota {dimensions = array<i32: 1>} : vector<4x256xi32>
    %c256_i32 = arith.constant 256 : i32
    %9 = vector.broadcast %c256_i32 : i32 to vector<4x256xi32>
    %10 = arith.muli %7, %9 : vector<4x256xi32>
    %11 = arith.addi %10, %8 : vector<4x256xi32>
    %12 = vector.broadcast %1 : i32 to vector<4x256xi32>
    %13 = arith.addi %11, %12 : vector<4x256xi32>
    %c16_i32 = arith.constant 16 : i32
    %14 = vector.broadcast %c16_i32 : i32 to vector<4x256xi32>
    %15 = arith.shrui %13, %14 : vector<4x256xi32>
    %16 = arith.xori %13, %15 : vector<4x256xi32>
    %c2146121005_i32 = arith.constant 2146121005 : i32
    %17 = vector.broadcast %c2146121005_i32 : i32 to vector<4x256xi32>
    %18 = arith.muli %16, %17 : vector<4x256xi32>
    %c15_i32 = arith.constant 15 : i32
    %19 = vector.broadcast %c15_i32 : i32 to vector<4x256xi32>
    %20 = arith.shrui %18, %19 : vector<4x256xi32>
    %21 = arith.xori %18, %20 : vector<4x256xi32>
    %c-2073254261_i32 = arith.constant -2073254261 : i32
    %22 = vector.broadcast %c-2073254261_i32 : i32 to vector<4x256xi32>
    %23 = arith.muli %21, %22 : vector<4x256xi32>
    %c16_i32_4 = arith.constant 16 : i32
    %24 = vector.broadcast %c16_i32_4 : i32 to vector<4x256xi32>
    %25 = arith.shrui %23, %24 : vector<4x256xi32>
    %26 = arith.xori %23, %25 : vector<4x256xi32>
    %c-1640531527_i32 = arith.constant -1640531527 : i32
    %27 = vector.broadcast %c-1640531527_i32 : i32 to vector<4x256xi32>
    %28 = arith.xori %26, %27 : vector<4x256xi32>
    %c16_i32_5 = arith.constant 16 : i32
    %29 = vector.broadcast %c16_i32_5 : i32 to vector<4x256xi32>
    %30 = arith.shrui %28, %29 : vector<4x256xi32>
    %31 = arith.xori %28, %30 : vector<4x256xi32>
    %c2146121005_i32_6 = arith.constant 2146121005 : i32
    %32 = vector.broadcast %c2146121005_i32_6 : i32 to vector<4x256xi32>
    %33 = arith.muli %31, %32 : vector<4x256xi32>
    %c15_i32_7 = arith.constant 15 : i32
    %34 = vector.broadcast %c15_i32_7 : i32 to vector<4x256xi32>
    %35 = arith.shrui %33, %34 : vector<4x256xi32>
    %36 = arith.xori %33, %35 : vector<4x256xi32>
    %c-2073254261_i32_8 = arith.constant -2073254261 : i32
    %37 = vector.broadcast %c-2073254261_i32_8 : i32 to vector<4x256xi32>
    %38 = arith.muli %36, %37 : vector<4x256xi32>
    %c16_i32_9 = arith.constant 16 : i32
    %39 = vector.broadcast %c16_i32_9 : i32 to vector<4x256xi32>
    %40 = arith.shrui %38, %39 : vector<4x256xi32>
    %41 = arith.xori %38, %40 : vector<4x256xi32>
    %c8_i32 = arith.constant 8 : i32
    %42 = vector.broadcast %c8_i32 : i32 to vector<4x256xi32>
    %43 = arith.shrui %41, %42 : vector<4x256xi32>
    %44 = arith.sitofp %43 : vector<4x256xi32> to vector<4x256xf32>
    %cst = arith.constant 5.96046448E-8 : f32
    %45 = vector.broadcast %cst : f32 to vector<4x256xf32>
    %46 = arith.mulf %44, %45 : vector<4x256xf32>
    %cst_10 = arith.constant 9.99999993E-9 : f32
    %47 = vector.broadcast %cst_10 : f32 to vector<4x256xf32>
    %48 = arith.addf %46, %47 : vector<4x256xf32>
    %49 = math.log %48 : vector<4x256xf32>
    %cst_11 = arith.constant 1.000000e+00 : f32
    %50 = vector.broadcast %cst_11 : f32 to vector<4x256xf32>
    %51 = arith.subf %50, %46 : vector<4x256xf32>
    %cst_12 = arith.constant 9.99999993E-9 : f32
    %52 = vector.broadcast %cst_12 : f32 to vector<4x256xf32>
    %53 = arith.addf %51, %52 : vector<4x256xf32>
    %54 = math.log %53 : vector<4x256xf32>
    %55 = arith.subf %49, %54 : vector<4x256xf32>
    %56 = arith.subf %2, %3 : vector<4x256xf32>
    %57 = arith.addf %56, %55 : vector<4x256xf32>
    %58 = vector.broadcast %0 : f32 to vector<4x256xf32>
    %59 = arith.mulf %57, %58 : vector<4x256xf32>
    %60 = math.absf %59 : vector<4x256xf32>
    %cst_13 = arith.constant 0.000000e+00 : f32
    %61 = vector.broadcast %cst_13 : f32 to vector<4x256xf32>
    %62 = arith.subf %61, %60 : vector<4x256xf32>
    %63 = math.exp %62 : vector<4x256xf32>
    %cst_14 = arith.constant 1.000000e+00 : f32
    %64 = vector.broadcast %cst_14 : f32 to vector<4x256xf32>
    %65 = arith.addf %64, %63 : vector<4x256xf32>
    %cst_15 = arith.constant 1.000000e+00 : f32
    %66 = vector.broadcast %cst_15 : f32 to vector<4x256xf32>
    %67 = arith.divf %66, %65 : vector<4x256xf32>
    %cst_16 = arith.constant 0.000000e+00 : f32
    %68 = vector.broadcast %cst_16 : f32 to vector<4x256xf32>
    %69 = arith.cmpf oge, %59, %68 : vector<4x256xf32>
    %70 = arith.mulf %63, %67 : vector<4x256xf32>
    %71 = arith.select %69, %67, %70 : vector<4x256xi1>, vector<4x256xf32>
    %cst_17 = arith.constant 1.000000e+00 : f32
    %72 = vector.broadcast %cst_17 : f32 to vector<4x256xf32>
    %73 = arith.subf %72, %71 : vector<4x256xf32>
    %74 = arith.mulf %2, %71 : vector<4x256xf32>
    %c0_18 = arith.constant 0 : index
    %c0_19 = arith.constant 0 : index
    %75 = vector.load %arg4[%c0_18, %c0_19] : memref<4x512xf32, #tpu.memory_space<vmem>>, vector<4x256xf32>
    tpu.vector_store %arg4[%c0_18, %c0_19], %74 {strides = array<i32>} : memref<4x512xf32, #tpu.memory_space<vmem>>, vector<4x256xf32>,
    %76 = arith.mulf %3, %73 : vector<4x256xf32>
    %c0_20 = arith.constant 0 : index
    %c256_21 = arith.constant 256 : index
    %77 = vector.load %arg4[%c0_20, %c256_21] : memref<4x512xf32, #tpu.memory_space<vmem>>, vector<4x256xf32>
    tpu.vector_store %arg4[%c0_20, %c256_21], %76 {strides = array<i32>} : memref<4x512xf32, #tpu.memory_space<vmem>>, vector<4x256xf32>,
    %cst_22 = arith.constant 1.000000e+00 : f32
    %78 = vector.broadcast %cst_22 : f32 to vector<4x256xf32>
    %79 = arith.addf %78, %63 : vector<4x256xf32>
    %80 = math.log %79 : vector<4x256xf32>
    %cst_23 = arith.constant 0.000000e+00 : f32
    %81 = vector.broadcast %cst_23 : f32 to vector<4x256xf32>
    %82 = arith.subf %81, %59 : vector<4x256xf32>
    %cst_24 = arith.constant 0.000000e+00 : f32
    %83 = vector.broadcast %cst_24 : f32 to vector<4x256xf32>
    %84 = arith.maximumf %82, %83 : vector<4x256xf32>
    %85 = arith.addf %84, %80 : vector<4x256xf32>
    %cst_25 = arith.constant 0.000000e+00 : f32
    %86 = vector.broadcast %cst_25 : f32 to vector<4x256xf32>
    %87 = arith.subf %86, %85 : vector<4x256xf32>
    %cst_26 = arith.constant 0.000000e+00 : f32
    %88 = vector.broadcast %cst_26 : f32 to vector<4x256xf32>
    %89 = arith.maximumf %59, %88 : vector<4x256xf32>
    %90 = arith.addf %89, %80 : vector<4x256xf32>
    %cst_27 = arith.constant 0.000000e+00 : f32
    %91 = vector.broadcast %cst_27 : f32 to vector<4x256xf32>
    %92 = arith.subf %91, %90 : vector<4x256xf32>
    %cst_28 = arith.constant -0.693147182 : f32
    %93 = vector.broadcast %cst_28 : f32 to vector<4x256xf32>
    %94 = arith.subf %87, %93 : vector<4x256xf32>
    %95 = arith.mulf %71, %94 : vector<4x256xf32>
    %cst_29 = arith.constant -0.693147182 : f32
    %96 = vector.broadcast %cst_29 : f32 to vector<4x256xf32>
    %97 = arith.subf %92, %96 : vector<4x256xf32>
    %98 = arith.mulf %73, %97 : vector<4x256xf32>
    %99 = arith.addf %95, %98 : vector<4x256xf32>
    %100 = vector.shape_cast %99 : vector<4x256xf32> to vector<1x4x256xf32>
    %cst_30 = arith.constant dense<0.000000e+00> : vector<1xf32>
    %101 = vector.multi_reduction <add>, %100, %cst_30 [1, 2] : vector<1x4x256xf32> to vector<1xf32>
    %102 = vector.shape_cast %101 : vector<1xf32> to vector<1x1x1xf32>
    %103 = vector.extract %102[0, 0, 0] : f32 from vector<1x1x1xf32>
    %104 = vector.broadcast %103 : f32 to vector<1x8x128xf32>
    %c0_31 = arith.constant 0 : index
    %c0_32 = arith.constant 0 : index
    %c0_33 = arith.constant 0 : index
    %105 = vector.load %arg5[%c0_31, %c0_32, %c0_33] : memref<1x8x128xf32, #tpu.memory_space<vmem>>, vector<1x8x128xf32>
    tpu.vector_store %arg5[%c0_31, %c0_32, %c0_33], %104 {strides = array<i32>} : memref<1x8x128xf32, #tpu.memory_space<vmem>>, vector<1x8x128xf32>,
    return
  }
  func.func @transform_0(%arg0: i32) -> i32 {
    %c0_i32 = arith.constant 0 : i32
    %c0_i32_0 = arith.constant 0 : i32
    return %c0_i32 : i32
  }
  func.func @transform_1(%arg0: i32) -> i32 {
    %c0_i32 = arith.constant 0 : i32
    %c0_i32_0 = arith.constant 0 : i32
    return %c0_i32 : i32
  }
  func.func @transform_2(%arg0: i32) -> (i32, i32) {
    %c0_i32 = arith.constant 0 : i32
    %c0_i32_0 = arith.constant 0 : i32
    return %arg0, %c0_i32 : i32, i32
  }
  func.func @transform_3(%arg0: i32) -> (i32, i32) {
    %c0_i32 = arith.constant 0 : i32
    %c0_i32_0 = arith.constant 0 : i32
    return %arg0, %c0_i32 : i32, i32
  }
  func.func @transform_4(%arg0: i32) -> (i32, i32, i32) {
    %c0_i32 = arith.constant 0 : i32
    %c0_i32_0 = arith.constant 0 : i32
    %c0_i32_1 = arith.constant 0 : i32
    return %arg0, %c0_i32, %c0_i32_0 : i32, i32, i32
  }
}

</mosaic_0001>

<llo_original>
// kernel: tpu_custom_call.1
$region0: #{tpu_custom_call.1}
  #allocation0 [shape = 'u32[]', space=smem, size = 0x4, offset = 0x4, fixed_abs, tag = 'smem constant byte address 0x4 - core index']
  #allocation1 [shape = 'u32[144,128]{1,0:T(1,128)}', space=vmem, size = 0x12000, scoped, tag = 'internal scratch']
  #allocation2 [shape = 's32[1]{0:T(128)S(6)}', space=smem, size = 0x200, scoped, tag = 'scoped memory for tpu_custom_call.1']
  #allocation3 [shape = 'f32[1]{0:T(128)S(6)}', space=smem, size = 0x200, scoped, tag = 'scoped memory for tpu_custom_call.1']
  %s0 = inlined_call_operand.<no memory space> [shape: s32[1], index: 0, kind: input, shape index: {}]
  %s1 = inlined_call_operand.<no memory space> [shape: f32[1], index: 1, kind: input, shape index: {}]
  %s2 = inlined_call_operand.hbm [shape: f32[4,512], index: 2, kind: input, shape index: {}]
  %s3 = inlined_call_operand.hbm [shape: f32[4,512], index: 3, kind: output, shape index: {0}]
  %s4 = inlined_call_operand.hbm [shape: f32[1,8,128], index: 4, kind: output, shape index: {1}]
  %5 = xla_tuple %s3, %s4
  %s6 = sld [smem:[#allocation0]]
  $region34: #{tpu_custom_call.1} parent=0
    _
  %s8 = ssub.s32 1, %s6
  %s9 = scalar_select 0, %s8, %s6
  %10 = sst [smem:[#allocation2]] %s0
  %11 = sst [smem:[#allocation3]] %s1
  $region1: #{tpu_custom_call.1} parent=0
    #allocation4 [shape = 'u8[8192]{0}', space=vmem, size = 0x2000, scoped, tag = 'input window, operand 2, single buffered']
    #allocation5 [shape = 's32[1]{0}', space=sflag, size = 0x4, scoped, tag = 'scoped memory for tpu_custom_call.1']
    #allocation6 [shape = 's32[1]{0}', space=sflag, size = 0x4, scoped, tag = 'scoped memory for tpu_custom_call.1']
    #allocation7 [shape = 'u8[8192]{0}', space=vmem, size = 0x2000, scoped, tag = 'output window, operand 0, single buffered']
    #allocation8 [shape = 'u8[4096]{0}', space=vmem, size = 0x1000, scoped, tag = 'output window, operand 1, single buffered']
    #allocation9 [shape = 's32[1]{0}', space=sflag, size = 0x4, scoped, tag = 'scoped memory for tpu_custom_call.1']
    %12 = vsyncpa [#allocation5], 0
    %13 = vsyncpa [#allocation6], 0
    %14 = vsyncpa [#allocation9], 0
    // Predicated region
    $region2: #{tpu_custom_call.1} parent=1 // pred_check
      _
    $region3: #{tpu_custom_call.1} parent=1 // pred_check_branch
      %16 = sbr.rel (0) target = $region5
    $region4: #{tpu_custom_call.1} parent=1 // pred_region
      _
    $region5: #{tpu_custom_call.1} parent=1 // pred_fallthru
      _
    // Predicated region
    $region6: #{tpu_custom_call.1} parent=1 // pred_check
      _
    $region7: #{tpu_custom_call.1} parent=1 // pred_check_branch
      %18 = sbr.rel (0) target = $region9
    $region8: #{tpu_custom_call.1} parent=1 // pred_region
      _
    $region9: #{tpu_custom_call.1} parent=1 // pred_fallthru
      _
    // Predicated region
    $region10: #{tpu_custom_call.1} parent=1 // pred_check
      _
    $region11: #{tpu_custom_call.1} parent=1 // pred_check_branch
      %20 = sbr.rel (0) target = $region13
    $region12: #{tpu_custom_call.1} parent=1 // pred_region
      %s22 = ssub.s32 256, 256
      %23 = vsyncadd [#allocation5], %s22
      %s25 = sshll.u32 [#allocation4], 4
      %s26 = int_to_ptr.vmem [resolvable:$true] %s25
      %28 = dma.hbm_to_vmem [thread:$0]  %s2, 256, %s26, [#allocation5]
    $region13: #{tpu_custom_call.1} parent=1 // pred_fallthru
      _
    // Predicated region
    $region14: #{tpu_custom_call.1} parent=1 // pred_check
      _
    $region15: #{tpu_custom_call.1} parent=1 // pred_check_branch
      %30 = sbr.rel (0) target = $region17
    $region16: #{tpu_custom_call.1} parent=1 // pred_region
      %31 = dma.done [#allocation5], 256
    $region17: #{tpu_custom_call.1} parent=1 // pred_fallthru
      _
    %s32 = sld [smem:[#allocation3]]
    %s33 = sld [smem:[#allocation2]]
    %v34 = vld [vmem:[#allocation4] sm:$0xff]
    %v35 = vld [vmem:[#allocation4 + $0x8] sm:$0xff]
    %v36 = vlaneseq
    %v37 = vshrl.u32 %v36, 7
    %s38 = smul.u32 0, 4
    %v39 = vstv %s38
    %v40 = vadd.s32 %v37, %v39
    %v41 = vlaneseq
    %v42 = vand.u32 %v41, 127
    %v43 = vadd.s32 %v42, 128
    %v44 = vmul.u32 %v40, 256
    %v45 = vadd.s32 %v44, %v42
    %v46 = vadd.s32 %v44, %v43
    %v47 = vstv %s33
    %v48 = vadd.s32 %v45, %v47
    %v49 = vadd.s32 %v46, %v47
    %v50 = vshrl.u32 %v48, 16
    %v51 = vshrl.u32 %v49, 16
    %v52 = vxor.u32 %v48, %v50
    %v53 = vxor.u32 %v49, %v51
    %v54 = vmul.u32 %v52, 2146121005
    %v55 = vmul.u32 %v53, 2146121005
    %v56 = vshrl.u32 %v54, 15
    %v57 = vshrl.u32 %v55, 15
    %v58 = vxor.u32 %v54, %v56
    %v59 = vxor.u32 %v55, %v57
    %v60 = vmul.u32 %v58, 2221713035
    %v61 = vmul.u32 %v59, 2221713035
    %v62 = vshrl.u32 %v60, 16
    %v63 = vshrl.u32 %v61, 16
    %v64 = vxor.u32 %v60, %v62
    %v65 = vxor.u32 %v61, %v63
    %v66 = vxor.u32 %v64, 2654435769
    %v67 = vxor.u32 %v65, 2654435769
    %v68 = vshrl.u32 %v66, 16
    %v69 = vshrl.u32 %v67, 16
    %v70 = vxor.u32 %v66, %v68
    %v71 = vxor.u32 %v67, %v69
    %v72 = vmul.u32 %v70, 2146121005
    %v73 = vmul.u32 %v71, 2146121005
    %v74 = vshrl.u32 %v72, 15
    %v75 = vshrl.u32 %v73, 15
    %v76 = vxor.u32 %v72, %v74
    %v77 = vxor.u32 %v73, %v75
    %v78 = vmul.u32 %v76, 2221713035
    %v79 = vmul.u32 %v77, 2221713035
    %v80 = vshrl.u32 %v78, 16
    %v81 = vshrl.u32 %v79, 16
    %v82 = vxor.u32 %v78, %v80
    %v83 = vxor.u32 %v79, %v81
    %v84 = vshrl.u32 %v82, 8
    %v85 = vshrl.u32 %v83, 8
    %v86 = vcvt.s32.f32 %v84
    %v87 = vcvt.s32.f32 %v85
    %v88 = vmul.f32 %v86, 5.9604645e-08
    %v89 = vmul.f32 %v87, 5.9604645e-08
    %v90 = vadd.f32 %v88, 1e-08
    %v91 = vadd.f32 %v89, 1e-08
    %v92 = vlog2.pop %v90
    %v93 = vmul.f32 %v92, 0.6931472
    %v94 = vlog2.pop %v91
    %v95 = vmul.f32 %v94, 0.6931472
    %v96 = vsub.f32 1.0, %v88
    %v97 = vsub.f32 1.0, %v89
    %v98 = vadd.f32 %v96, 1e-08
    %v99 = vadd.f32 %v97, 1e-08
    %v100 = vlog2.pop %v98
    %v101 = vmul.f32 %v100, 0.6931472
    %v102 = vlog2.pop %v99
    %v103 = vmul.f32 %v102, 0.6931472
    %v104 = vsub.f32 %v93, %v101
    %v105 = vsub.f32 %v95, %v103
    %v106 = vsub.f32 %v34, %v35
    %v109 = vcombine.low %v104, %v105
    %v111 = vadd.f32 %v106, %v109
    %v112 = vstv %s32
    %v113 = vmul.f32 %v111, %v112
    %v114 = vand.u32 2147483647, %v113
    %v115 = vsub.f32 0.0, %v114
    %v116 = vmul.f32 %v115, 1.442695
    %v117 = vpow.pop %v116
    %v118 = vadd.f32 %v117, 1.0
    %v119 = vrcp.pop %v118
    %v120 = vmul.f32 1.0, %v119
    %vm121 = vcmp.ge.f32.partialorder %v113, 0.0
    %v122 = vmul.f32 %v117, %v120
    %v123 = vsel %vm121, %v120, %v122
    %v124 = vsub.f32 1.0, %v123
    %v125 = vmul.f32 %v34, %v123
    %126 = vst [vmem:[#allocation7] sm:$0xff] %v125
    %v127 = vmul.f32 %v35, %v124
    %128 = vst [vmem:[#allocation7 + $0x8] sm:$0xff] %v127
    %v129 = vlog2.pop %v118
    %v130 = vmul.f32 %v129, 0.6931472
    %v131 = vsub.f32 0.0, %v113
    %v132 = vmax.f32 %v131, 0.0
    %v133 = vadd.f32 %v132, %v130
    %v134 = vsub.f32 0.0, %v133
    %v135 = vmax.f32 %v113, 0.0
    %v136 = vadd.f32 %v135, %v130
    %v137 = vsub.f32 0.0, %v136
    %v138 = vsub.f32 %v134, -0.6931472
    %v139 = vmul.f32 %v123, %v138
    %v140 = vsub.f32 %v137, -0.6931472
    %v141 = vmul.f32 %v124, %v140
    %v142 = vadd.f32 %v139, %v141
    %v144 = vcombine.high %v142, %v142
    %vm146 = vcmask 1043456
    %v147 = vsel %vm146, %v142, 0.0
    %v148 = vsel %vm146, %v144, 0.0
    %v149 = vadd.f32 %v147, %v148
    %150 = vadd.xlane.f32.xlu0 %v149
    %v151 = vpop.xlane.xlu0 %150
    %v152 = vrot.slane %v151, 4
    %v153 = vadd.f32 %v151, %v152
    %v154 = vrot.slane %v153, 2
    %v155 = vadd.f32 %v153, %v154
    %v156 = vrot.slane %v155, 1
    %v157 = vadd.f32 %v155, %v156
    %s158 = vtos %v157
    %v159 = vstv %s158
    %160 = vst [vmem:[#allocation8] sm:$0xff] %v159
    // Predicated region
    $region18: #{tpu_custom_call.1} parent=1 // pred_check
      _
    $region19: #{tpu_custom_call.1} parent=1 // pred_check_branch
      %162 = sbr.rel (0) target = $region21
    $region20: #{tpu_custom_call.1} parent=1 // pred_region
      %s164 = ssub.s32 256, 256
      %165 = vsyncadd [#allocation6], %s164
      %s167 = sshll.u32 [#allocation7], 4
      %s168 = int_to_ptr.vmem [resolvable:$true] %s167
      %170 = dma.vmem_to_hbm [thread:$0]  %s168, 256, %s3, [#allocation6]
    $region21: #{tpu_custom_call.1} parent=1 // pred_fallthru
      _
    // Predicated region
    $region22: #{tpu_custom_call.1} parent=1 // pred_check
      _
    $region23: #{tpu_custom_call.1} parent=1 // pred_check_branch
      %172 = sbr.rel (0) target = $region25
    $region24: #{tpu_custom_call.1} parent=1 // pred_region
      %s174 = ssub.s32 128, 128
      %175 = vsyncadd [#allocation9], %s174
      %s177 = sshll.u32 [#allocation8], 4
      %s178 = int_to_ptr.vmem [resolvable:$true] %s177
      %180 = dma.vmem_to_hbm [thread:$0]  %s178, 128, %s4, [#allocation9]
    $region25: #{tpu_custom_call.1} parent=1 // pred_fallthru
      _
    // Predicated region
    $region26: #{tpu_custom_call.1} parent=1 // pred_check
      _
    $region27: #{tpu_custom_call.1} parent=1 // pred_check_branch
      %182 = sbr.rel (0) target = $region29
    $region28: #{tpu_custom_call.1} parent=1 // pred_region
      %183 = dma.done [#allocation6], 256
    $region29: #{tpu_custom_call.1} parent=1 // pred_fallthru
      _
    // Predicated region
    $region30: #{tpu_custom_call.1} parent=1 // pred_check
      _
    $region31: #{tpu_custom_call.1} parent=1 // pred_check_branch
      %185 = sbr.rel (0) target = $region33
    $region32: #{tpu_custom_call.1} parent=1 // pred_region
      %186 = dma.done [#allocation9], 128
    $region33: #{tpu_custom_call.1} parent=1 // pred_fallthru
      _
    %187 = vsyncpa [#allocation5], 1
    %188 = vsyncpa [#allocation6], 1
    %189 = vsyncpa [#allocation9], 1

</llo_original>
